<compile_context>
chip_gen: v6e
topology: v6e:2x2x1
jax: 0.10.0
libtpu: 0.0.40
codegen_flags: <defaults>
</compile_context>

<pallas_src>
import functools
import math

import jax
import jax.numpy as jnp
import numpy as np
from jax.experimental import pallas as pl
from jax.experimental.pallas import tpu as pltpu


# ----------------------------------------------------------------------------
# Parameter construction (mirrors CSQLoss.__init__ / get_hash_targets)
# ----------------------------------------------------------------------------
def sylvester_hadamard(n):
    assert n & (n - 1) == 0 and n > 0, "bit must be a power of 2"
    H = np.array([[1.0]], dtype=np.float32)
    while H.shape[0] < n:
        H = np.block([[H, H], [H, -H]])
    return H


def get_hash_targets(n_class, bit):
    H_K = sylvester_hadamard(bit)
    H_2K = np.concatenate((H_K, -H_K), axis=0)
    assert H_2K.shape[0] >= n_class, "n_class must be <= 2*bit for this setup"
    # TODO(synk): host-side random-search fallback for n_class > 2*bit (the
    # rejection-sampling loop in the original __init__) not implemented.
    return jnp.asarray(H_2K[:n_class], dtype=jnp.float32)


# ----------------------------------------------------------------------------
# Pallas kernel: one packed batch tile -> (8, L) partial sums of (bce + lam*q)
# ----------------------------------------------------------------------------
def csq_loss_kernel(u_ref, hc_ref, out_ref, *, lam):
    # Elementwise math in f32 (v5e has no bf16 VPU/EUP datapath).
    u = jnp.tanh(u_ref[...].astype(jnp.float32))          # (TN, L)  EUP
    hc = hc_ref[...].astype(jnp.float32)                  # +-1 (0 on padding)

    # BCE(0.5*(u+1), 0.5*(hc+1)) with target t in {0,1}: only one log needed.
    # torch.nn.BCELoss clamps log terms at -100 (handles tanh saturation).
    p = 0.5 * (u + 1.0)
    sel = jnp.where(hc > 0.0, p, 1.0 - p)
    bce = -jnp.maximum(jnp.log(sel), -100.0)               # EUP

    # Quantization term, fused with BCE into a single reduction
    # (both means share the N*bit denominator).
    q = (jnp.abs(u) - 1.0) ** 2
    per_elem = bce + jnp.float32(lam) * q                  # (TN, L)

    # Partial sums: fold the sublane-tile groups so all 8 output sublanes
    # carry real data (no broadcast/iota/select, unmasked lane-dense store).
    tn, lanes = per_elem.shape
    out_ref[...] = jnp.sum(per_elem.reshape(tn // 8, 8, lanes), axis=0)


# ----------------------------------------------------------------------------
# Wrapper (forward pass of CSQLoss, single-label path)
# ----------------------------------------------------------------------------
def csq_loss(u, y, hash_targets, lam, *, tile_n=512):
    n, bit = u.shape

    # Host/XLA-side label -> hash-center gather; bf16 is exact for +-1.
    labels = jnp.argmax(y, axis=1)
    hc = jnp.take(hash_targets.astype(jnp.bfloat16), labels, axis=0)  # (n, bit)
    # TODO(synk): multi-label branch of label2center (sign of y @ hash_targets
    # with random-center tie-break) not implemented; this is the single-label path.

    # Lane packing: pack k original rows into one 128-lane-wide packed row.
    k = 128 // bit if (bit < 128 and 128 % bit == 0) else 1
    lanes = k * bit

    # Packed-row tile: multiple of 8, capped at tile_n, and sized so the
    # parallel grid has >= 2 steps whenever the batch allows it (v7x megacore
    # + DMA/compute overlap on all chips).
    m_needed = -(-n // k)
    half = -(-m_needed // 2)
    tn = min(int(tile_n), ((max(half, 1) + 7) // 8) * 8)
    tn = max(8, (tn // 8) * 8)
    num_tiles = max(1, -(-m_needed // tn))
    m_pad = num_tiles * tn
    n_pad = m_pad * k

    u_p = u.astype(jnp.float32)
    if n_pad != n:
        u_p = jnp.pad(u_p, ((0, n_pad - n), (0, 0)))
        hc = jnp.pad(hc, ((0, n_pad - n), (0, 0)))
    u_p = u_p.reshape(m_pad, lanes)
    hc_p = hc.reshape(m_pad, lanes)

    kernel = functools.partial(csq_loss_kernel, lam=float(lam))

    partials = pl.pallas_call(
        kernel,
        out_shape=jax.ShapeDtypeStruct((num_tiles * 8, lanes), jnp.float32),
        grid=(num_tiles,),
        in_specs=[
            pl.BlockSpec((tn, lanes), lambda i: (i, 0)),
            pl.BlockSpec((tn, lanes), lambda i: (i, 0)),
        ],
        out_specs=pl.BlockSpec((8, lanes), lambda i: (i, 0)),
        compiler_params=pltpu.CompilerParams(
            dimension_semantics=("parallel",)),
        cost_estimate=pl.CostEstimate(
            flops=12 * n_pad * bit,
            transcendentals=2 * n_pad * bit,
            bytes_accessed=n_pad * bit * (4 + 2) + num_tiles * 8 * lanes * 4),
    )(u_p, hc_p)

    # Tiny finishing reduction outside the kernel, plus the closed-form
    # correction for zero-padded rows: u=0 -> p=0.5, hc=0 -> (1-p) branch,
    # q=1  =>  each padded element contributes exactly (ln 2 + lam).
    total = jnp.sum(partials)
    pad_correction = float((n_pad - n) * bit) * (math.log(2.0) + float(lam))
    return (total - jnp.float32(pad_correction)) / jnp.float32(n * bit)


# ----------------------------------------------------------------------------
# Pure-JAX reference for correctness check
# ----------------------------------------------------------------------------
def csq_loss_ref(u, y, hash_targets, lam):
    u = jnp.tanh(u.astype(jnp.float32))
    hc = hash_targets[jnp.argmax(y, axis=1)]
    p = 0.5 * (u + 1.0)
    t = 0.5 * (hc + 1.0)
    log_p = jnp.maximum(jnp.log(p), -100.0)
    log_1mp = jnp.maximum(jnp.log(1.0 - p), -100.0)
    center_loss = jnp.mean(-(t * log_p + (1.0 - t) * log_1mp))
    q_loss = jnp.mean((jnp.abs(u) - 1.0) ** 2)
    return center_loss + lam * q_loss


if __name__ == "__main__":
    # Small, deterministic setup (single-label dataset, e.g. cifar10-like)
    N, BIT, N_CLASS = 64, 32, 16
    LAMBDA = 0.0001

    key = jax.random.PRNGKey(0)
    k_u, k_lbl, k_rc, k_u2, k_lbl2 = jax.random.split(key, 5)

    u = jax.random.normal(k_u, (N, BIT), dtype=jnp.float32)
    labels = jax.random.randint(k_lbl, (N,), 0, N_CLASS)
    y = jax.nn.one_hot(labels, N_CLASS, dtype=jnp.float32)

    hash_targets = get_hash_targets(N_CLASS, BIT)
    # multi_label_random_center (unused in the single-label path, kept for parity)
    multi_label_random_center = jax.random.randint(k_rc, (BIT,), 0, 2).astype(jnp.float32)

    loss = csq_loss(u, y, hash_targets, LAMBDA)
    jax.block_until_ready(loss)
    ref = csq_loss_ref(u, y, hash_targets, LAMBDA)
    np.testing.assert_allclose(np.asarray(loss), np.asarray(ref), rtol=1e-5, atol=1e-5)

    # Ragged batch (exercises the closed-form padding correction).
    N2 = 50
    u2 = jax.random.normal(k_u2, (N2, BIT), dtype=jnp.float32)
    labels2 = jax.random.randint(k_lbl2, (N2,), 0, N_CLASS)
    y2 = jax.nn.one_hot(labels2, N_CLASS, dtype=jnp.float32)
    loss2 = csq_loss(u2, y2, hash_targets, LAMBDA)
    jax.block_until_ready(loss2)
    ref2 = csq_loss_ref(u2, y2, hash_targets, LAMBDA)
    np.testing.assert_allclose(np.asarray(loss2), np.asarray(ref2), rtol=1e-5, atol=1e-5)

    print("KERNEL_OK")
</pallas_src>

<mosaic_0001>
module attributes {stable_mosaic.version = 11 : i64} {
  func.func @csq_loss_kernel(%arg0: i32, %arg1: memref<8x128xf32, #tpu.memory_space<vmem>>, %arg2: memref<8x128xbf16, #tpu.memory_space<vmem>>, %arg3: memref<8x128xf32, #tpu.memory_space<vmem>>) attributes {dimension_semantics = [#tpu.dimension_semantics<parallel>], iteration_bounds = array<i64: 2>, scalar_prefetch = 0 : i64, scratch_operands = 0 : i64, tpu.core_type = #tpu.core_type<tc>, window_params = [{transform_indices = @transform_0, window_bounds = array<i64: 8, 128>}, {transform_indices = @transform_1, window_bounds = array<i64: 8, 128>}, {transform_indices = @transform_2, window_bounds = array<i64: 8, 128>}]} {
    %c0 = arith.constant 0 : index
    %c0_0 = arith.constant 0 : index
    %0 = vector.load %arg1[%c0, %c0_0] : memref<8x128xf32, #tpu.memory_space<vmem>>, vector<8x128xf32>
    %1 = math.tanh %0 : vector<8x128xf32>
    %c0_1 = arith.constant 0 : index
    %c0_2 = arith.constant 0 : index
    %2 = vector.load %arg2[%c0_1, %c0_2] : memref<8x128xbf16, #tpu.memory_space<vmem>>, vector<8x128xbf16>
    %3 = arith.extf %2 : vector<8x128xbf16> to vector<8x128xf32>
    %cst = arith.constant 1.000000e+00 : f32
    %4 = vector.broadcast %cst : f32 to vector<8x128xf32>
    %5 = arith.addf %1, %4 : vector<8x128xf32>
    %cst_3 = arith.constant 5.000000e-01 : f32
    %6 = vector.broadcast %cst_3 : f32 to vector<8x128xf32>
    %7 = arith.mulf %6, %5 : vector<8x128xf32>
    %cst_4 = arith.constant 0.000000e+00 : f32
    %8 = vector.broadcast %cst_4 : f32 to vector<8x128xf32>
    %9 = arith.cmpf ogt, %3, %8 : vector<8x128xf32>
    %cst_5 = arith.constant 1.000000e+00 : f32
    %10 = vector.broadcast %cst_5 : f32 to vector<8x128xf32>
    %11 = arith.subf %10, %7 : vector<8x128xf32>
    %12 = arith.select %9, %7, %11 : vector<8x128xi1>, vector<8x128xf32>
    %13 = math.log %12 : vector<8x128xf32>
    %cst_6 = arith.constant -1.000000e+02 : f32
    %14 = vector.broadcast %cst_6 : f32 to vector<8x128xf32>
    %15 = arith.maximumf %13, %14 : vector<8x128xf32>
    %cst_7 = arith.constant 0.000000e+00 : f32
    %16 = vector.broadcast %cst_7 : f32 to vector<8x128xf32>
    %17 = arith.subf %16, %15 : vector<8x128xf32>
    %18 = math.absf %1 : vector<8x128xf32>
    %cst_8 = arith.constant 1.000000e+00 : f32
    %19 = vector.broadcast %cst_8 : f32 to vector<8x128xf32>
    %20 = arith.subf %18, %19 : vector<8x128xf32>
    %21 = arith.mulf %20, %20 : vector<8x128xf32>
    %cst_9 = arith.constant 9.99999974E-5 : f32
    %22 = vector.broadcast %cst_9 : f32 to vector<8x128xf32>
    %23 = arith.mulf %22, %21 : vector<8x128xf32>
    %24 = arith.addf %17, %23 : vector<8x128xf32>
    %25 = vector.shape_cast %24 : vector<8x128xf32> to vector<1x8x128xf32>
    %cst_10 = arith.constant dense<0.000000e+00> : vector<8x128xf32>
    %26 = vector.multi_reduction <add>, %25, %cst_10 [0] : vector<1x8x128xf32> to vector<8x128xf32>
    %c0_11 = arith.constant 0 : index
    %c0_12 = arith.constant 0 : index
    %27 = vector.load %arg3[%c0_11, %c0_12] : memref<8x128xf32, #tpu.memory_space<vmem>>, vector<8x128xf32>
    tpu.vector_store %arg3[%c0_11, %c0_12], %26 {strides = array<i32>} : memref<8x128xf32, #tpu.memory_space<vmem>>, vector<8x128xf32>,
    return
  }
  func.func @transform_0(%arg0: i32) -> (i32, i32) {
    %c0_i32 = arith.constant 0 : i32
    %c0_i32_0 = arith.constant 0 : i32
    return %arg0, %c0_i32 : i32, i32
  }
  func.func @transform_1(%arg0: i32) -> (i32, i32) {
    %c0_i32 = arith.constant 0 : i32
    %c0_i32_0 = arith.constant 0 : i32
    return %arg0, %c0_i32 : i32, i32
  }
  func.func @transform_2(%arg0: i32) -> (i32, i32) {
    %c0_i32 = arith.constant 0 : i32
    %c0_i32_0 = arith.constant 0 : i32
    return %arg0, %c0_i32 : i32, i32
  }
}

</mosaic_0001>

<llo_original>
// kernel: tpu_custom_call.1
$region0: #{tpu_custom_call.1}
  #allocation0 [shape = 'u32[]', space=smem, size = 0x4, offset = 0x4, fixed_abs, tag = 'smem constant byte address 0x4 - core index']
  #allocation1 [shape = 'u32[144,128]{1,0:T(1,128)}', space=vmem, size = 0x12000, scoped, tag = 'internal scratch']
  %s0 = inlined_call_operand.hbm [shape: f32[16,128], index: 0, kind: input, shape index: {}]
  %s1 = inlined_call_operand.hbm [shape: bf16[16,128], index: 1, kind: input, shape index: {}]
  %s2 = inlined_call_operand.hbm [shape: f32[16,128], index: 2, kind: output, shape index: {}]
  %s3 = sld [smem:[#allocation0]]
  $region49: #{tpu_custom_call.1} parent=0
    _
  %s5 = ssub.s32 1, %s3
  %s6 = scalar_select 0, %s5, %s3
  $region1: #{tpu_custom_call.1} parent=0
    #allocation2 [shape = 'u8[8192]{0}', space=vmem, size = 0x2000, scoped, tag = 'input window, operand 0']
    #allocation3 [shape = 's32[2]{0}', space=sflag, size = 0x8, scoped, tag = 'scoped memory for tpu_custom_call.1']
    #allocation4 [shape = 's32[2]{0}', space=sflag, size = 0x8, scoped, tag = 'scoped memory for tpu_custom_call.1']
    #allocation5 [shape = 'u8[4096]{0}', space=vmem, size = 0x1000, scoped, tag = 'input window, operand 1']
    #allocation6 [shape = 's32[2]{0}', space=sflag, size = 0x8, scoped, tag = 'scoped memory for tpu_custom_call.1']
    #allocation7 [shape = 'u8[8192]{0}', space=vmem, size = 0x2000, scoped, tag = 'output window, operand 0']
    %7 = vsyncpa [#allocation3], 0
    %s8 = scalar_lea.sflag [#allocation3], 1
    %9 = vsyncpa %s8, 0
    %10 = vsyncpa [#allocation6], 0
    %s11 = scalar_lea.sflag [#allocation6], 1
    %12 = vsyncpa %s11, 0
    %13 = vsyncpa [#allocation4], 0
    %s14 = scalar_lea.sflag [#allocation4], 1
    %15 = vsyncpa %s14, 0
    loop: start=0, step=1, limit=4
    $region2: #{tpu_custom_call.1} parent=1 // loop_pre_header
      _
    $region3: #{tpu_custom_call.1} parent=1 // loop_header
      %s17 = sphi 0, %s21
      %p18 = scmp.ge.s32.totalorder %s17, 4
      %s27 = sphi 0, %s29
      %s30 = sphi 0, %s27
      %s31 = sphi 0, %s30
      %s47 = sphi 0, %s31
      %s53 = sphi 0, %s55
      %s56 = sphi 0, %s53
      %s57 = sphi 0, %s56
      %s73 = sphi 0, %s57
      %s79 = sphi 0, %s81
      %s82 = sphi 0, %s79
      %s83 = sphi 0, %s82
      %s99 = sphi 0, %s83
    $region4: #{tpu_custom_call.1} parent=1 // loop_header_branch
      %20 = sbr.rel (%p18) target = $region8
    $region5: #{tpu_custom_call.1} parent=1 // loop_body
      %s22 = ssub.s32 %s17, 1
      %s23 = ssub.s32 %s17, 2
      %s24 = sadd.s32 %s17, 1
      %s25 = ssub.s32 %s17, %s24
      %p26 = scmp.eq.s32.totalorder %s25, 0
      %s28 = sadd.s32 %s27, 1
      %s29 = scalar_select %p26, %s27, %s28
      %p32 = pneg %p26
      %p33 = scmp.eq.s32.totalorder %s17, 1
      %p34 = por %p32, %p33
      %p35 = scmp.ne.s32.totalorder %s27, %s30
      %p36 = scmp.eq.s32.totalorder %s17, 0
      %p37 = por %p35, %p36
      %p38 = scmp.ne.s32.totalorder %s27, %s30
      %p39 = scmp.eq.s32.totalorder %s22, 1
      %p40 = por %p38, %p39
      %p41 = scmp.ne.s32.totalorder %s30, %s31
      %p42 = scmp.eq.s32.totalorder %s22, 0
      %p43 = por %p41, %p42
      %p44 = scmp.ne.s32.totalorder %s30, %s31
      %p45 = scmp.eq.s32.totalorder %s23, 1
      %p46 = por %p44, %p45
      %p48 = scmp.ne.s32.totalorder %s31, %s47
      %p49 = scmp.eq.s32.totalorder %s23, 0
      %p50 = por %p48, %p49
      %s51 = ssub.s32 %s17, %s24
      %p52 = scmp.eq.s32.totalorder %s51, 0
      %s54 = sadd.s32 %s53, 1
      %s55 = scalar_select %p52, %s53, %s54
      %p58 = pneg %p52
      %p59 = scmp.eq.s32.totalorder %s17, 1
      %p60 = por %p58, %p59
      %p61 = scmp.ne.s32.totalorder %s53, %s56
      %p62 = scmp.eq.s32.totalorder %s17, 0
      %p63 = por %p61, %p62
      %p64 = scmp.ne.s32.totalorder %s53, %s56
      %p65 = scmp.eq.s32.totalorder %s22, 1
      %p66 = por %p64, %p65
      %p67 = scmp.ne.s32.totalorder %s56, %s57
      %p68 = scmp.eq.s32.totalorder %s22, 0
      %p69 = por %p67, %p68
      %p70 = scmp.ne.s32.totalorder %s56, %s57
      %p71 = scmp.eq.s32.totalorder %s23, 1
      %p72 = por %p70, %p71
      %p74 = scmp.ne.s32.totalorder %s57, %s73
      %p75 = scmp.eq.s32.totalorder %s23, 0
      %p76 = por %p74, %p75
      %s77 = ssub.s32 %s17, %s24
      %p78 = scmp.eq.s32.totalorder %s77, 0
      %s80 = sadd.s32 %s79, 1
      %s81 = scalar_select %p78, %s79, %s80
      %p84 = pneg %p78
      %p85 = scmp.eq.s32.totalorder %s17, 1
      %p86 = por %p84, %p85
      %p87 = scmp.ne.s32.totalorder %s79, %s82
      %p88 = scmp.eq.s32.totalorder %s17, 0
      %p89 = por %p87, %p88
      %p90 = scmp.ne.s32.totalorder %s79, %s82
      %p91 = scmp.eq.s32.totalorder %s22, 1
      %p92 = por %p90, %p91
      %p93 = scmp.ne.s32.totalorder %s82, %s83
      %p94 = scmp.eq.s32.totalorder %s22, 0
      %p95 = por %p93, %p94
      %p96 = scmp.ne.s32.totalorder %s82, %s83
      %p97 = scmp.eq.s32.totalorder %s23, 1
      %p98 = por %p96, %p97
      %p100 = scmp.ne.s32.totalorder %s83, %s99
      %p101 = scmp.eq.s32.totalorder %s23, 0
      %p102 = por %p100, %p101
      %p103 = scmp.le.s32.totalorder 1, %s17
      %p104 = scmp.lt.s32.totalorder %s17, 3
      %p105 = pnand %p103, %p104
      %p106 = pneg %p105
      // Predicated region
      $region9: #{tpu_custom_call.1} parent=5 // pred_check
        _
      $region10: #{tpu_custom_call.1} parent=5 // pred_check_branch
        %108 = sbr.rel (%p105) target = $region12
      $region11: #{tpu_custom_call.1} parent=5 // pred_region
        %s109 = ssub.s32 %s17, 1
      $region12: #{tpu_custom_call.1} parent=5 // pred_fallthru
        _
      %p110 = scmp.lt.s32.totalorder %s17, 2
      // Predicated region
      $region13: #{tpu_custom_call.1} parent=5 // pred_check
        %p111 = pneg %p110
      $region14: #{tpu_custom_call.1} parent=5 // pred_check_branch
        %113 = sbr.rel (%p111) target = $region16
      $region15: #{tpu_custom_call.1} parent=5 // pred_region
        // Predicated region
        $region17: #{tpu_custom_call.1} parent=15 // pred_check
          %p114 = pneg %p37
        $region18: #{tpu_custom_call.1} parent=15 // pred_check_branch
          %116 = sbr.rel (%p114) target = $region20
        $region19: #{tpu_custom_call.1} parent=15 // pred_region
          %s117 = sand.u32 %s27, 1
          %s118 = scalar_lea.sflag [#allocation3], %s117
          %s119 = sand.u32 %s27, 1
          %s120 = smul.addr %s119, 8
          %s121 = scalar_lea.vmem [#allocation2], %s120
          %s123 = ssub.s32 128, 128
          %124 = vsyncadd %s118, %s123
          %s125 = smul.addr %s17, 128
          %s126 = scalar_lea.hbm %s0, %s125
          %s128 = sshll.u32 %s121, 4
          %s129 = int_to_ptr.vmem [resolvable:$true] %s128
          %131 = dma.hbm_to_vmem [thread:$0]  %s126, 128, %s129, %s118
        $region20: #{tpu_custom_call.1} parent=15 // pred_fallthru
          _
        // Predicated region
        $region21: #{tpu_custom_call.1} parent=15 // pred_check
          %p132 = pneg %p63
        $region22: #{tpu_custom_call.1} parent=15 // pred_check_branch
          %134 = sbr.rel (%p132) target = $region24
        $region23: #{tpu_custom_call.1} parent=15 // pred_region
          %s135 = sand.u32 %s53, 1
          %s136 = scalar_lea.sflag [#allocation6], %s135
          %s137 = sand.u32 %s53, 1
          %s138 = smul.addr %s137, 4
          %s139 = scalar_lea.vmem [#allocation5], %s138
          %s141 = ssub.s32 64, 64
          %142 = vsyncadd %s136, %s141
          %s143 = smul.addr %s17, 64
          %s144 = scalar_lea.hbm %s1, %s143
          %s146 = sshll.u32 %s139, 4
          %s147 = int_to_ptr.vmem [resolvable:$true] %s146
          %149 = dma.hbm_to_vmem [thread:$0]  %s144, 64, %s147, %s136
        $region24: #{tpu_custom_call.1} parent=15 // pred_fallthru
          _
      $region16: #{tpu_custom_call.1} parent=5 // pred_fallthru
        _
      %p150 = scmp.le.s32.totalorder 1, %s17
      %p151 = scmp.lt.s32.totalorder %s17, 3
      %p152 = pnand %p150, %p151
      %p153 = pneg %p152
      // Predicated region
      $region25: #{tpu_custom_call.1} parent=5 // pred_check
        _
      $region26: #{tpu_custom_call.1} parent=5 // pred_check_branch
        %155 = sbr.rel (%p152) target = $region28
      $region27: #{tpu_custom_call.1} parent=5 // pred_region
        %s156 = ssub.s32 %s17, 1
        %s157 = sand.u32 %s30, 1
        %s158 = scalar_lea.sflag [#allocation3], %s157
        %s159 = sand.u32 %s30, 1
        %s160 = smul.addr %s159, 8
        %s161 = scalar_lea.vmem [#allocation2], %s160
        // Predicated region
        $region29: #{tpu_custom_call.1} parent=27 // pred_check
          %p162 = pneg %p43
        $region30: #{tpu_custom_call.1} parent=27 // pred_check_branch
          %164 = sbr.rel (%p162) target = $region32
        $region31: #{tpu_custom_call.1} parent=27 // pred_region
          %165 = dma.done %s158, 128
        $region32: #{tpu_custom_call.1} parent=27 // pred_fallthru
          _
        %s166 = sand.u32 %s56, 1
        %s167 = scalar_lea.sflag [#allocation6], %s166
        %s168 = sand.u32 %s56, 1
        %s169 = smul.addr %s168, 4
        %s170 = scalar_lea.vmem [#allocation5], %s169
        // Predicated region
        $region33: #{tpu_custom_call.1} parent=27 // pred_check
          %p171 = pneg %p69
        $region34: #{tpu_custom_call.1} parent=27 // pred_check_branch
          %173 = sbr.rel (%p171) target = $region36
        $region35: #{tpu_custom_call.1} parent=27 // pred_region
          %174 = dma.done %s167, 64
        $region36: #{tpu_custom_call.1} parent=27 // pred_fallthru
          _
        %s175 = sand.u32 %s30, 1
        %s176 = scalar_lea.sflag [#allocation3], %s175
        %s177 = sand.u32 %s30, 1
        %s178 = smul.addr %s177, 8
        %s179 = scalar_lea.vmem [#allocation2], %s178
        %p180 = pneg %p43
        %p181 = pneg %p40
        %s182 = sand.u32 %s56, 1
        %s183 = scalar_lea.sflag [#allocation6], %s182
        %s184 = sand.u32 %s56, 1
        %s185 = smul.addr %s184, 4
        %s186 = scalar_lea.vmem [#allocation5], %s185
        %p187 = pneg %p69
        %p188 = pneg %p66
        %p189 = pneg %p95
        %p190 = pneg %p92
        %s191 = sand.u32 %s82, 1
        %s192 = scalar_lea.sflag [#allocation4], %s191
        %s193 = sand.u32 %s82, 1
        %s194 = smul.addr %s193, 8
        %s195 = scalar_lea.vmem [#allocation7], %s194
        %v196 = vld [vmem:[%s161] sm:$0xff]
        %v197 = vtanh.pop %v196
        %v198 = vld [vmem:[%s170] sm:$0xf]
        %v199 = vunpack.c.l.bf16 %v198
        %v200 = vadd.f32 %v197, 1.0
        %v201 = vmul.f32 %v200, 0.5
        %vm202 = vcmp.gt.f32.partialorder %v199, 0.0
        %v203 = vsub.f32 1.0, %v201
        %v204 = vsel %vm202, %v201, %v203
        %v205 = vlog2.pop %v204
        %v206 = vmul.f32 %v205, 0.6931472
        %v207 = vmax.f32 %v206, -100.0
        %v208 = vsub.f32 0.0, %v207
        %v209 = vand.u32 2147483647, %v197
        %v210 = vsub.f32 %v209, 1.0
        %v211 = vmul.f32 %v210, %v210
        %v212 = vmul.f32 %v211, 0.0001
        %v213 = vadd.f32 %v208, %v212
        %v214 = vadd.f32 %v213, 0.0
        %215 = vst [vmem:[%s195] sm:$0xff] %v214
        %s216 = sand.u32 %s82, 1
        %s217 = scalar_lea.sflag [#allocation4], %s216
        %s218 = sand.u32 %s82, 1
        %s219 = smul.addr %s218, 8
        %s220 = scalar_lea.vmem [#allocation7], %s219
        // Predicated region
        $region37: #{tpu_custom_call.1} parent=27 // pred_check
          %p221 = pneg %p92
        $region38: #{tpu_custom_call.1} parent=27 // pred_check_branch
          %223 = sbr.rel (%p221) target = $region40
        $region39: #{tpu_custom_call.1} parent=27 // pred_region
          %s225 = ssub.s32 128, 128
          %226 = vsyncadd %s217, %s225
          %s227 = smul.addr %s22, 128
          %s228 = scalar_lea.hbm %s2, %s227
          %s230 = sshll.u32 %s220, 4
          %s231 = int_to_ptr.vmem [resolvable:$true] %s230
          %233 = dma.vmem_to_hbm [thread:$0]  %s231, 128, %s228, %s217
        $region40: #{tpu_custom_call.1} parent=27 // pred_fallthru
          _
      $region28: #{tpu_custom_call.1} parent=5 // pred_fallthru
        _
      %p234 = scmp.le.s32.totalorder 2, %s17
      // Predicated region
      $region41: #{tpu_custom_call.1} parent=5 // pred_check
        %p235 = pneg %p234
      $region42: #{tpu_custom_call.1} parent=5 // pred_check_branch
        %237 = sbr.rel (%p235) target = $region44
      $region43: #{tpu_custom_call.1} parent=5 // pred_region
        %s238 = ssub.s32 %s17, 2
        // Predicated region
        $region45: #{tpu_custom_call.1} parent=43 // pred_check
          %p239 = pneg %p98
        $region46: #{tpu_custom_call.1} parent=43 // pred_check_branch
          %241 = sbr.rel (%p239) target = $region48
        $region47: #{tpu_custom_call.1} parent=43 // pred_region
          %s242 = sand.u32 %s83, 1
          %s243 = scalar_lea.sflag [#allocation4], %s242
          %s244 = sand.u32 %s83, 1
          %s245 = smul.addr %s244, 8
          %s246 = scalar_lea.vmem [#allocation7], %s245
          %247 = dma.done %s243, 128
        $region48: #{tpu_custom_call.1} parent=43 // pred_fallthru
          _
      $region44: #{tpu_custom_call.1} parent=5 // pred_fallthru
        _
    $region6: #{tpu_custom_call.1} parent=1 // loop_footer
      %s21 = sadd.s32 1, %s17
    $region7: #{tpu_custom_call.1} parent=1 // loop_footer_branch
      %16 = sbr.rel target = $region3
    $region8: #{tpu_custom_call.1} parent=1 // loop_exit
      _
    %248 = vsyncpa [#allocation3], 1
    %s249 = scalar_lea.sflag [#allocation3], 1
    %250 = vsyncpa %s249, 1
    %251 = vsyncpa [#allocation6], 1
    %s252 = scalar_lea.sflag [#allocation6], 1
    %253 = vsyncpa %s252, 1
    %254 = vsyncpa [#allocation4], 1
    %s255 = scalar_lea.sflag [#allocation4], 1
    %256 = vsyncpa %s255, 1

</llo_original>
